<compile_context>
chip_gen: v7x
topology: tpu7x:2x2x1
jax: 0.10.0
libtpu: 0.0.40
codegen_flags: <defaults>
</compile_context>

<pallas_src>
import functools

import jax
import jax.numpy as jnp
import numpy as np
from jax import lax
from jax.experimental import pallas as pl
from jax.experimental.pallas import tpu as pltpu


# --------------------------- Embedding kernel --------------------------------

def _embed_assemble_kernel(g_ref, t_ref, cf_ref, w_ref, b_ref, o_ref, *,
                           l_out, n_filters):
    """Writes the full token-embedding slab in one kernel:
         o[:, :Dg]      = GLoVE embeddings   (copy)
         o[:, Dg:Dg+Dt] = Turian embeddings  (copy)
         o[:, Dg+Dt:]   = CharCNN feature    = max_j relu((chars @ W_toeplitz)[:, j])
    cf_ref is the flattened char-embedding slab (NW, Wc*Dc); w_ref is the
    block-Toeplitz conv weight (Wc*Dc, L_out*F) in bf16 so one MXU matmul
    produces all conv positions along the lane axis."""
    Dg = g_ref.shape[1]
    Dt = t_ref.shape[1]
    F = n_filters
    o_ref[:, 0:Dg] = g_ref[...]
    o_ref[:, Dg:Dg + Dt] = t_ref[...]
    y = jnp.dot(cf_ref[...].astype(jnp.bfloat16), w_ref[...],
                preferred_element_type=jnp.float32) + b_ref[...]
    y = jnp.maximum(y, 0.0)
    acc = y[:, 0:F]
    for j in range(1, l_out):                     # lane-segmented max, tiny trip
        acc = jnp.maximum(acc, y[:, j * F:(j + 1) * F])
    o_ref[:, Dg + Dt:Dg + Dt + F] = acc


def embed_assemble(glove_e, turian_e, char_flat, w_toep, b_tiled, *,
                   l_out, n_filters):
    NW, Dg = glove_e.shape
    Dt = turian_e.shape[1]
    KC = char_flat.shape[1]
    LF = w_toep.shape[1]
    Demb = Dg + Dt + n_filters
    kernel = functools.partial(_embed_assemble_kernel, l_out=l_out,
                               n_filters=n_filters)
    return pl.pallas_call(
        kernel,
        out_shape=jax.ShapeDtypeStruct((NW, Demb), jnp.float32),
        grid=(1,),
        in_specs=[pl.BlockSpec((NW, Dg), lambda i: (0, 0)),
                  pl.BlockSpec((NW, Dt), lambda i: (0, 0)),
                  pl.BlockSpec((NW, KC), lambda i: (0, 0)),
                  pl.BlockSpec((KC, LF), lambda i: (0, 0)),
                  pl.BlockSpec((1, LF), lambda i: (0, 0))],
        out_specs=pl.BlockSpec((NW, Demb), lambda i: (0, 0)),
        compiler_params=pltpu.CompilerParams(
            dimension_semantics=("arbitrary",)),
    )(glove_e, turian_e, char_flat, w_toep, b_tiled)


# --------------------------- Fused 2-layer biLSTM kernel ----------------------

def _lstm_cell(gates, h, c, m, is_g, scale, H):
    """One LSTM cell update for a (B, 4H) gate block.  Single tanh over the full
    gate width: sigmoid(x) = 0.5*(1 + tanh(x/2)) for the i/f/o columns."""
    t = jnp.tanh(gates * scale)
    act = jnp.where(is_g, t, 0.5 * (t + 1.0))
    i_g = act[:, 0:H]
    f_g = act[:, H:2 * H]
    g_g = act[:, 2 * H:3 * H]
    o_g = act[:, 3 * H:4 * H]
    c_new = f_g * c + i_g * g_g
    h_new = o_g * jnp.tanh(c_new)
    c = m * c_new + (1.0 - m) * c          # freeze state on padded positions
    h = m * h_new + (1.0 - m) * h
    return h, c


def _recurrence(xg, mask, whh_f, whh_b, *, T, B, H):
    """Both directions of one biLSTM layer.  xg: (T*B, 8H) precomputed input
    projection + bias, columns [i f g o]_fwd | [i f g o]_bwd.  Returns the full
    fwd/bwd h histories in time order, each (T*B, H)."""
    lane = lax.broadcasted_iota(jnp.int32, (B, 4 * H), 1)
    is_g = (lane >= 2 * H) & (lane < 3 * H)
    scale = jnp.where(is_g, jnp.float32(1.0), jnp.float32(0.5))
    h_f = jnp.zeros((B, H), jnp.float32)
    c_f = jnp.zeros((B, H), jnp.float32)
    h_b = jnp.zeros((B, H), jnp.float32)
    c_b = jnp.zeros((B, H), jnp.float32)
    hs_f, hs_b = [], []
    # Statically unrolled time loop (small T in this demo): step s advances the
    # fwd direction at t=s and the bwd direction at t=T-1-s; per-(t,b) masking
    # reproduces packed-sequence semantics with no gathers/transposes.
    # TODO(synk): lax.fori_loop + VMEM scratch for large T (bounds live ranges).
    for s in range(T):
        tf, tb = s, T - 1 - s
        g_f = xg[tf * B:(tf + 1) * B, 0:4 * H] + jnp.dot(
            h_f.astype(jnp.bfloat16), whh_f, preferred_element_type=jnp.float32)
        g_b = xg[tb * B:(tb + 1) * B, 4 * H:8 * H] + jnp.dot(
            h_b.astype(jnp.bfloat16), whh_b, preferred_element_type=jnp.float32)
        m_f = mask[tf * B:(tf + 1) * B, :]
        m_b = mask[tb * B:(tb + 1) * B, :]
        h_f, c_f = _lstm_cell(g_f, h_f, c_f, m_f, is_g, scale, H)
        h_b, c_b = _lstm_cell(g_b, h_b, c_b, m_b, is_g, scale, H)
        hs_f.append(h_f)
        hs_b.append(h_b)
    fwd_hist = jnp.concatenate(hs_f, axis=0)          # rows in time order
    bwd_hist = jnp.concatenate(hs_b[::-1], axis=0)    # reorder to time order
    return fwd_hist, bwd_hist


def _bilstm_stack_kernel(x_ref, mask_ref, *rest, T, B, H, n_layers):
    """All biLSTM layers fused in one kernel; inter-layer activations stay as
    in-register/VMEM values (never written to HBM).  Per layer the weights are
    (wih (D,8H) bf16, whh_f (H,4H) bf16, whh_b (H,4H) bf16, b (1,8H) f32)."""
    out_ref = rest[-1]
    wrefs = rest[:-1]
    mask = mask_ref[...]                              # (T*B, 1)

    # Layer 0: one fused (T*B, D) @ (D, 8H) bf16 input projection (both dirs).
    wih0, whhf0, whhb0, b0 = wrefs[0:4]
    xg = jnp.dot(x_ref[...].astype(jnp.bfloat16), wih0[...],
                 preferred_element_type=jnp.float32) + b0[...]
    fwd_h, bwd_h = _recurrence(xg, mask, whhf0[...], whhb0[...], T=T, B=B, H=H)

    for l in range(1, n_layers):
        wih, whhf, whhb, b = wrefs[4 * l:4 * l + 4]
        w = wih[...]                                  # (2H, 8H) bf16
        # Split-row input projection avoids materializing the lane-concatenated
        # (T*B, 2H) inter-layer activation (mathematically identical).
        xg = (jnp.dot(fwd_h.astype(jnp.bfloat16), w[0:H, :],
                      preferred_element_type=jnp.float32)
              + jnp.dot(bwd_h.astype(jnp.bfloat16), w[H:2 * H, :],
                        preferred_element_type=jnp.float32)
              + b[...])
        fwd_h, bwd_h = _recurrence(xg, mask, whhf[...], whhb[...], T=T, B=B, H=H)

    # Two bulk sublane-dense stores (no per-step masked (B, H) stores).
    out_ref[:, 0:H] = fwd_h
    out_ref[:, H:2 * H] = bwd_h


def bilstm_stack(x, layer_weights, mask, *, T, B, H):
    NW, D0 = x.shape
    n_layers = len(layer_weights)
    in_arrays = [x, mask]
    in_specs = [pl.BlockSpec((NW, D0), lambda i: (0, 0)),
                pl.BlockSpec((NW, 1), lambda i: (0, 0))]
    for (wih, whh_f, whh_b, b) in layer_weights:
        in_arrays += [wih, whh_f, whh_b, b]
        in_specs += [pl.BlockSpec(wih.shape, lambda i: (0, 0)),
                     pl.BlockSpec((H, 4 * H), lambda i: (0, 0)),
                     pl.BlockSpec((H, 4 * H), lambda i: (0, 0)),
                     pl.BlockSpec((1, 8 * H), lambda i: (0, 0))]
    kernel = functools.partial(_bilstm_stack_kernel, T=T, B=B, H=H,
                               n_layers=n_layers)
    return pl.pallas_call(
        kernel,
        out_shape=jax.ShapeDtypeStruct((NW, 2 * H), jnp.float32),
        grid=(1,),
        in_specs=in_specs,
        out_specs=pl.BlockSpec((NW, 2 * H), lambda i: (0, 0)),
        compiler_params=pltpu.CompilerParams(
            dimension_semantics=("arbitrary",)),     # sequential recurrence
    )(*in_arrays)


def pack_bilstm_weights(layer_params):
    """Repack PyTorch-layout per-direction LSTM weights:
       wih   (D, 8H) bf16 : columns [i f g o]_fwd | [i f g o]_bwd
       whh_f (H, 4H) bf16, whh_b (H, 4H) bf16 (no zero block-diagonal padding)
       b     (1, 8H) f32  : b_ih + b_hh in the same column order."""
    def pack_dir(w_ih, w_hh, b_ih, b_hh):
        return w_ih.T, w_hh.T, b_ih + b_hh
    wf, hf, bf = pack_dir(*layer_params['fwd'])
    wb, hb, bb = pack_dir(*layer_params['bwd'])
    wih = jnp.concatenate([wf, wb], axis=1).astype(jnp.bfloat16)     # (D, 8H)
    b = jnp.concatenate([bf, bb]).reshape(1, -1).astype(jnp.float32)  # (1, 8H)
    return wih, hf.astype(jnp.bfloat16), hb.astype(jnp.bfloat16), b


# --------------------------- Encoder glue ------------------------------------

def encode_document(params, glove_ids, turian_ids, char_ids, lengths_list):
    """Returns (states, embeds) exactly as LSTMDocumentEncoder.forward:
       states: (total_tokens, 2*hidden_dim), embeds: (total_tokens, emb_dim)."""
    B_real, T = glove_ids.shape
    Wc = char_ids.shape[-1]
    H = params['lstm'][0]['fwd'][1].shape[1]

    # Pad batch to a multiple of 8 sublanes; padded sentences have length 0 and
    # are fully masked, their rows are dropped on unpack.
    B = ((B_real + 7) // 8) * 8
    pad = B - B_real
    if pad:
        glove_ids = jnp.concatenate(
            [glove_ids, jnp.zeros((pad, T), glove_ids.dtype)], axis=0)
        turian_ids = jnp.concatenate(
            [turian_ids, jnp.zeros((pad, T), turian_ids.dtype)], axis=0)
        char_ids = jnp.concatenate(
            [char_ids, jnp.zeros((pad, T, Wc), char_ids.dtype)], axis=0)
    lengths_all = list(lengths_list) + [0] * pad
    NW = T * B

    # Time-major token order everywhere (row = t*B + b); only tiny integer id
    # arrays are transposed, never the wide activations.
    g_ids = glove_ids.T.reshape(NW)
    t_ids = turian_ids.T.reshape(NW)
    c_ids = char_ids.transpose(1, 0, 2).reshape(NW, Wc)

    glove_e = params['glove'][g_ids]                    # (NW, Dg)
    turian_e = params['turian'][t_ids]                  # (NW, Dt)
    char_e = params['char_emb'][c_ids]                  # (NW, Wc, Dc)
    k, Dc, F = params['char_conv_w'].shape
    L_out = Wc - k + 1
    char_flat = char_e.reshape(NW, Wc * Dc)             # no im2col blow-up

    # Block-Toeplitz conv weight: one matmul produces every conv position along
    # the lane axis (L_out*F lanes), max-over-positions done inside the kernel.
    # TODO(synk): exact CharCNN architecture is not shown in the reference; a
    # standard char-embed -> Conv1d(k) -> ReLU -> max-over-time is implemented.
    w_flat = params['char_conv_w'].reshape(k * Dc, F)
    w_toep = jnp.zeros((Wc * Dc, L_out * F), jnp.float32)
    for j in range(L_out):
        w_toep = w_toep.at[j * Dc:j * Dc + k * Dc, j * F:(j + 1) * F].set(w_flat)
    w_toep = w_toep.astype(jnp.bfloat16)
    b_tiled = jnp.tile(params['char_conv_b'], L_out).reshape(1, L_out * F)

    # Fused glove|turian|CharCNN embedding slab: one Pallas kernel, one matmul.
    embeds = embed_assemble(glove_e, turian_e, char_flat, w_toep, b_tiled,
                            l_out=L_out, n_filters=F)
    # emb_dropout / lstm_dropout: results discarded in the reference -> no-op.

    # Per-(t, b) validity mask (packed-sequence semantics for the biLSTM).
    lengths = jnp.asarray(lengths_all)
    mask = (jnp.arange(T)[:, None] < lengths[None, :]).astype(jnp.float32)
    mask = mask.reshape(NW, 1)

    layer_weights = [pack_bilstm_weights(layer) for layer in params['lstm']]
    x = bilstm_stack(embeds, layer_weights, mask, T=T, B=B, H=H)    # (NW, 2H)

    # unpack_and_unpad + torch.cat(dim=0): valid tokens per sentence, in order.
    x_tm = x.reshape(T, B, 2 * H)
    e_tm = embeds.reshape(T, B, embeds.shape[-1])
    states = jnp.concatenate(
        [x_tm[:lengths_list[b], b] for b in range(B_real)], axis=0)
    embeds_out = jnp.concatenate(
        [e_tm[:lengths_list[b], b] for b in range(B_real)], axis=0)
    return states, embeds_out


# --------------------------- Pure-JAX reference (for checking) ---------------
# Mirrors the same bf16-operand / f32-accumulation matmul casting the kernels
# use, so the parity check stays tight.

def reverse_within_length(x, lengths):
    T = x.shape[1]
    t = jnp.arange(T)[None, :]
    L = jnp.asarray(lengths)[:, None]
    idx = jnp.where(t < L, L - 1 - t, t)
    return jnp.take_along_axis(x, idx[..., None], axis=1)


def ref_lstm_direction(x, w_ih, w_hh, b_ih, b_hh):
    B, T, D = x.shape
    H = w_hh.shape[1]
    xg = jnp.dot(x.reshape(B * T, D).astype(jnp.bfloat16),
                 w_ih.T.astype(jnp.bfloat16),
                 preferred_element_type=jnp.float32).reshape(B, T, 4 * H)
    xg = xg + b_ih + b_hh
    w_hh_t = w_hh.T.astype(jnp.bfloat16)

    def step(carry, xg_t):
        h, c = carry
        gates = xg_t + jnp.dot(h.astype(jnp.bfloat16), w_hh_t,
                               preferred_element_type=jnp.float32)
        i = jax.nn.sigmoid(gates[:, :H])
        f = jax.nn.sigmoid(gates[:, H:2 * H])
        g = jnp.tanh(gates[:, 2 * H:3 * H])
        o = jax.nn.sigmoid(gates[:, 3 * H:])
        c = f * c + i * g
        h = o * jnp.tanh(c)
        return (h, c), h

    init = (jnp.zeros((B, H), jnp.float32), jnp.zeros((B, H), jnp.float32))
    _, hs = lax.scan(step, init, xg.transpose(1, 0, 2))
    return hs.transpose(1, 0, 2)


def ref_encode_document(params, glove_ids, turian_ids, char_ids, lengths_list):
    B, T = glove_ids.shape
    Wc = char_ids.shape[-1]
    g = params['glove'][glove_ids]
    tu = params['turian'][turian_ids]
    ce = params['char_emb'][char_ids].reshape(B * T, Wc, -1)
    k, Dc, F = params['char_conv_w'].shape
    L_out = Wc - k + 1
    patches = jnp.concatenate([ce[:, j:j + L_out, :] for j in range(k)], axis=-1)
    w_mat = params['char_conv_w'].reshape(k * Dc, F)
    conv = jnp.dot(patches.reshape(-1, k * Dc).astype(jnp.bfloat16),
                   w_mat.astype(jnp.bfloat16),
                   preferred_element_type=jnp.float32).reshape(B * T, L_out, F)
    char_feat = jnp.maximum(conv + params['char_conv_b'], 0.0).max(axis=1)
    embeds = jnp.concatenate([g, tu, char_feat.reshape(B, T, F)], axis=-1)
    x = embeds
    for layer in params['lstm']:
        fwd = ref_lstm_direction(x, *layer['fwd'])
        x_rev = reverse_within_length(x, lengths_list)
        bwd = ref_lstm_direction(x_rev, *layer['bwd'])
        bwd = reverse_within_length(bwd, lengths_list)
        x = jnp.concatenate([fwd, bwd], axis=-1)
    states = jnp.concatenate([x[b, :lengths_list[b]] for b in range(B)], axis=0)
    embeds_out = jnp.concatenate([embeds[b, :lengths_list[b]] for b in range(B)],
                                 axis=0)
    return states, embeds_out


# --------------------------- Params ------------------------------------------

def init_params(key, *, glove_vocab, glove_dim, turian_vocab, turian_dim,
                char_vocab, char_dim, char_k, char_filters, hidden_dim, n_layers):
    ks = iter(jax.random.split(key, 8 + 8 * n_layers))

    def l2norm(w):  # F.normalize over rows
        return w / jnp.maximum(jnp.linalg.norm(w, axis=1, keepdims=True), 1e-12)

    p = {
        'glove': l2norm(jax.random.normal(next(ks), (glove_vocab, glove_dim),
                                          jnp.float32)),
        'turian': l2norm(jax.random.normal(next(ks), (turian_vocab, turian_dim),
                                           jnp.float32)),
        'char_emb': 0.1 * jax.random.normal(next(ks), (char_vocab, char_dim),
                                            jnp.float32),
        'char_conv_w': 0.1 * jax.random.normal(next(ks),
                                               (char_k, char_dim, char_filters),
                                               jnp.float32),
        'char_conv_b': 0.1 * jax.random.normal(next(ks), (char_filters,),
                                               jnp.float32),
        'lstm': [],
    }
    emb_dim = glove_dim + turian_dim + char_filters
    s = 1.0 / np.sqrt(hidden_dim)
    for layer in range(n_layers):
        d_in = emb_dim if layer == 0 else 2 * hidden_dim
        layer_p = {}
        for direction in ('fwd', 'bwd'):
            w_ih = jax.random.uniform(next(ks), (4 * hidden_dim, d_in),
                                      jnp.float32, -s, s)
            w_hh = jax.random.uniform(next(ks), (4 * hidden_dim, hidden_dim),
                                      jnp.float32, -s, s)
            b_ih = jax.random.uniform(next(ks), (4 * hidden_dim,),
                                      jnp.float32, -s, s)
            b_hh = jax.random.uniform(next(ks), (4 * hidden_dim,),
                                      jnp.float32, -s, s)
            layer_p[direction] = (w_ih, w_hh, b_ih, b_hh)
        p['lstm'].append(layer_p)
    return p


# --------------------------- Main --------------------------------------------

if __name__ == "__main__":
    hidden_dim, char_filters, n_layers = 32, 16, 2
    glove_dim, turian_dim = 64, 16
    glove_vocab, turian_vocab, char_vocab = 50, 50, 40
    char_dim, char_k, word_len = 8, 3, 6
    B, T = 4, 8                       # 4 sentences, padded to 8 tokens
    lengths = [7, 5, 8, 6]            # variable sentence lengths
    total_tokens = sum(lengths)

    key = jax.random.PRNGKey(0)
    k_par, k_g, k_t, k_c = jax.random.split(key, 4)
    params = init_params(k_par, glove_vocab=glove_vocab, glove_dim=glove_dim,
                         turian_vocab=turian_vocab, turian_dim=turian_dim,
                         char_vocab=char_vocab, char_dim=char_dim, char_k=char_k,
                         char_filters=char_filters, hidden_dim=hidden_dim,
                         n_layers=n_layers)

    glove_ids = jax.random.randint(k_g, (B, T), 0, glove_vocab)
    turian_ids = jax.random.randint(k_t, (B, T), 0, turian_vocab)
    char_ids = jax.random.randint(k_c, (B, T, word_len), 0, char_vocab)

    states, embeds = encode_document(params, glove_ids, turian_ids, char_ids,
                                     lengths)
    jax.block_until_ready(states)
    jax.block_until_ready(embeds)

    # Verify against a pure-JAX reference of the same math (same bf16 casting).
    ref_states, ref_embeds = ref_encode_document(params, glove_ids, turian_ids,
                                                 char_ids, lengths)
    assert states.shape == (total_tokens, 2 * hidden_dim)
    assert embeds.shape == (total_tokens, glove_dim + turian_dim + char_filters)
    np.testing.assert_allclose(np.asarray(embeds), np.asarray(ref_embeds),
                               rtol=1e-3, atol=1e-3)
    np.testing.assert_allclose(np.asarray(states), np.asarray(ref_states),
                               rtol=5e-3, atol=5e-3)
    print("KERNEL_OK")
</pallas_src>

<mosaic_0001>
module attributes {stable_mosaic.version = 11 : i64} {
  func.func @_embed_assemble_kernel(%arg0: i32, %arg1: memref<64x64xf32, #tpu.memory_space<vmem>>, %arg2: memref<64x16xf32, #tpu.memory_space<vmem>>, %arg3: memref<64x48xf32, #tpu.memory_space<vmem>>, %arg4: memref<48x64xbf16, #tpu.memory_space<vmem>>, %arg5: memref<1x64xf32, #tpu.memory_space<vmem>>, %arg6: memref<64x96xf32, #tpu.memory_space<vmem>>) attributes {dimension_semantics = [#tpu.dimension_semantics<arbitrary>], iteration_bounds = array<i64: 1>, scalar_prefetch = 0 : i64, scratch_operands = 0 : i64, tpu.core_type = #tpu.core_type<tc>, window_params = [{pipeline_mode = #tpu.pipeline_mode<synchronous>, transform_indices = @transform_0, window_bounds = array<i64: 64, 64>}, {pipeline_mode = #tpu.pipeline_mode<synchronous>, transform_indices = @transform_1, window_bounds = array<i64: 64, 16>}, {pipeline_mode = #tpu.pipeline_mode<synchronous>, transform_indices = @transform_2, window_bounds = array<i64: 64, 48>}, {pipeline_mode = #tpu.pipeline_mode<synchronous>, transform_indices = @transform_3, window_bounds = array<i64: 48, 64>}, {pipeline_mode = #tpu.pipeline_mode<synchronous>, transform_indices = @transform_4, window_bounds = array<i64: 1, 64>}, {pipeline_mode = #tpu.pipeline_mode<synchronous>, transform_indices = @transform_5, window_bounds = array<i64: 64, 96>}]} {
    %c0 = arith.constant 0 : index
    %c0_0 = arith.constant 0 : index
    %0 = vector.load %arg1[%c0, %c0_0] : memref<64x64xf32, #tpu.memory_space<vmem>>, vector<64x64xf32>
    %c0_1 = arith.constant 0 : index
    %c0_2 = arith.constant 0 : index
    %1 = vector.load %arg6[%c0_1, %c0_2] : memref<64x96xf32, #tpu.memory_space<vmem>>, vector<64x64xf32>
    tpu.vector_store %arg6[%c0_1, %c0_2], %0 {strides = array<i32>} : memref<64x96xf32, #tpu.memory_space<vmem>>, vector<64x64xf32>,
    %c0_3 = arith.constant 0 : index
    %c0_4 = arith.constant 0 : index
    %2 = vector.load %arg2[%c0_3, %c0_4] : memref<64x16xf32, #tpu.memory_space<vmem>>, vector<64x16xf32>
    %c0_5 = arith.constant 0 : index
    %c64 = arith.constant 64 : index
    %3 = vector.load %arg6[%c0_5, %c64] : memref<64x96xf32, #tpu.memory_space<vmem>>, vector<64x16xf32>
    tpu.vector_store %arg6[%c0_5, %c64], %2 {strides = array<i32>} : memref<64x96xf32, #tpu.memory_space<vmem>>, vector<64x16xf32>,
    %c0_6 = arith.constant 0 : index
    %c0_7 = arith.constant 0 : index
    %4 = vector.load %arg3[%c0_6, %c0_7] : memref<64x48xf32, #tpu.memory_space<vmem>>, vector<64x48xf32>
    %5 = arith.truncf %4 : vector<64x48xf32> to vector<64x48xbf16>
    %c0_8 = arith.constant 0 : index
    %c0_9 = arith.constant 0 : index
    %6 = vector.load %arg4[%c0_8, %c0_9] : memref<48x64xbf16, #tpu.memory_space<vmem>>, vector<48x64xbf16>
    %cst = arith.constant dense<0.000000e+00> : vector<64x64xf32>
    %7 = tpu.matmul %5, %6, %cst {dimension_numbers = #tpu.dot_dimension_numbers<[1], [0], [0], [1], [0, 0, 1, 1], [], []>} : vector<64x48xbf16>, vector<48x64xbf16>, vector<64x64xf32> -> vector<64x64xf32>
    %c0_10 = arith.constant 0 : index
    %c0_11 = arith.constant 0 : index
    %8 = vector.load %arg5[%c0_10, %c0_11] : memref<1x64xf32, #tpu.memory_space<vmem>>, vector<1x64xf32>
    %9 = vector.broadcast %8 : vector<1x64xf32> to vector<64x64xf32>
    %10 = arith.addf %7, %9 : vector<64x64xf32>
    %cst_12 = arith.constant 0.000000e+00 : f32
    %11 = vector.broadcast %cst_12 : f32 to vector<64x64xf32>
    %12 = arith.maximumf %10, %11 : vector<64x64xf32>
    %13 = vector.extract_strided_slice %12 {offsets = [0, 0], sizes = [64, 16], strides = [1, 1]} : vector<64x64xf32> to vector<64x16xf32>
    %14 = vector.extract_strided_slice %12 {offsets = [0, 16], sizes = [64, 16], strides = [1, 1]} : vector<64x64xf32> to vector<64x16xf32>
    %15 = arith.maximumf %13, %14 : vector<64x16xf32>
    %16 = vector.extract_strided_slice %12 {offsets = [0, 32], sizes = [64, 16], strides = [1, 1]} : vector<64x64xf32> to vector<64x16xf32>
    %17 = arith.maximumf %15, %16 : vector<64x16xf32>
    %18 = vector.extract_strided_slice %12 {offsets = [0, 48], sizes = [64, 16], strides = [1, 1]} : vector<64x64xf32> to vector<64x16xf32>
    %19 = arith.maximumf %17, %18 : vector<64x16xf32>
    %c0_13 = arith.constant 0 : index
    %c80 = arith.constant 80 : index
    %20 = vector.load %arg6[%c0_13, %c80] : memref<64x96xf32, #tpu.memory_space<vmem>>, vector<64x16xf32>
    tpu.vector_store %arg6[%c0_13, %c80], %19 {strides = array<i32>} : memref<64x96xf32, #tpu.memory_space<vmem>>, vector<64x16xf32>,
    return
  }
  func.func @transform_0(%arg0: i32) -> (i32, i32) {
    %c0_i32 = arith.constant 0 : i32
    %c0_i32_0 = arith.constant 0 : i32
    %c0_i32_1 = arith.constant 0 : i32
    return %c0_i32, %c0_i32_0 : i32, i32
  }
  func.func @transform_1(%arg0: i32) -> (i32, i32) {
    %c0_i32 = arith.constant 0 : i32
    %c0_i32_0 = arith.constant 0 : i32
    %c0_i32_1 = arith.constant 0 : i32
    return %c0_i32, %c0_i32_0 : i32, i32
  }
  func.func @transform_2(%arg0: i32) -> (i32, i32) {
    %c0_i32 = arith.constant 0 : i32
    %c0_i32_0 = arith.constant 0 : i32
    %c0_i32_1 = arith.constant 0 : i32
    return %c0_i32, %c0_i32_0 : i32, i32
  }
  func.func @transform_3(%arg0: i32) -> (i32, i32) {
    %c0_i32 = arith.constant 0 : i32
    %c0_i32_0 = arith.constant 0 : i32
    %c0_i32_1 = arith.constant 0 : i32
    return %c0_i32, %c0_i32_0 : i32, i32
  }
  func.func @transform_4(%arg0: i32) -> (i32, i32) {
    %c0_i32 = arith.constant 0 : i32
    %c0_i32_0 = arith.constant 0 : i32
    %c0_i32_1 = arith.constant 0 : i32
    return %c0_i32, %c0_i32_0 : i32, i32
  }
  func.func @transform_5(%arg0: i32) -> (i32, i32) {
    %c0_i32 = arith.constant 0 : i32
    %c0_i32_0 = arith.constant 0 : i32
    %c0_i32_1 = arith.constant 0 : i32
    return %c0_i32, %c0_i32_0 : i32, i32
  }
}

</mosaic_0001>

<llo_original>
// kernel: tpu_custom_call.1
$region0: #{tpu_custom_call.1}
  #allocation0 [shape = 'u32[]', space=smem, size = 0x4, offset = 0x4, fixed_abs, tag = 'smem constant byte address 0x4 - core index']
  #allocation1 [shape = 'u32[144,128]{1,0:T(1,128)}', space=vmem, size = 0x12000, scoped, tag = 'internal scratch']
  %s0 = inlined_call_operand.vmem [shape: f32[64,64], index: 0, kind: input, shape index: {}]
  %s1 = inlined_call_operand.vmem [shape: f32[64,16], index: 1, kind: input, shape index: {}]
  %s2 = inlined_call_operand.vmem [shape: f32[64,48], index: 2, kind: input, shape index: {}]
  %s3 = inlined_call_operand.vmem [shape: bf16[48,64], index: 3, kind: input, shape index: {}]
  %s4 = inlined_call_operand.vmem [shape: f32[1,64], index: 4, kind: input, shape index: {}]
  %s5 = inlined_call_operand.hbm [shape: f32[64,96], index: 5, kind: output, shape index: {}]
  %s6 = sld [smem:[#allocation0]]
  $region30: #{tpu_custom_call.1} parent=0
    _
  %s8 = ssub.s32 1, %s6
  %s9 = scalar_select 0, %s8, %s6
  $region1: #{tpu_custom_call.1} parent=0
    #allocation2 [shape = 'u8[32768]{0}', space=vmem, size = 0x8000, scoped, tag = 'output window, operand 0, single buffered']
    #allocation3 [shape = 's32[1]{0}', space=sflag, size = 0x4, scoped, tag = 'scoped memory for tpu_custom_call.1']
    %10 = vsyncpa [#allocation3], 0
    // Predicated region
    $region2: #{tpu_custom_call.1} parent=1 // pred_check
      _
    $region3: #{tpu_custom_call.1} parent=1 // pred_check_branch
      %12 = sbr.rel (0) target = $region5
    $region4: #{tpu_custom_call.1} parent=1 // pred_region
      _
    $region5: #{tpu_custom_call.1} parent=1 // pred_fallthru
      _
    // Predicated region
    $region6: #{tpu_custom_call.1} parent=1 // pred_check
      _
    $region7: #{tpu_custom_call.1} parent=1 // pred_check_branch
      %14 = sbr.rel (0) target = $region9
    $region8: #{tpu_custom_call.1} parent=1 // pred_region
      _
    $region9: #{tpu_custom_call.1} parent=1 // pred_fallthru
      _
    // Predicated region
    $region10: #{tpu_custom_call.1} parent=1 // pred_check
      _
    $region11: #{tpu_custom_call.1} parent=1 // pred_check_branch
      %16 = sbr.rel (0) target = $region13
    $region12: #{tpu_custom_call.1} parent=1 // pred_region
      _
    $region13: #{tpu_custom_call.1} parent=1 // pred_fallthru
      _
    // Predicated region
    $region14: #{tpu_custom_call.1} parent=1 // pred_check
      _
    $region15: #{tpu_custom_call.1} parent=1 // pred_check_branch
      %18 = sbr.rel (0) target = $region17
    $region16: #{tpu_custom_call.1} parent=1 // pred_region
      _
    $region17: #{tpu_custom_call.1} parent=1 // pred_fallthru
      _
    // Predicated region
    $region18: #{tpu_custom_call.1} parent=1 // pred_check
      _
    $region19: #{tpu_custom_call.1} parent=1 // pred_check_branch
      %20 = sbr.rel (0) target = $region21
    $region20: #{tpu_custom_call.1} parent=1 // pred_region
      _
    $region21: #{tpu_custom_call.1} parent=1 // pred_fallthru
      _
    %v22 = vld [vmem:[%s0] sm:$0xff]
    %v23 = vld [vmem:[%s0 + $0x8] sm:$0xff]
    %v24 = vld [vmem:[%s0 + $0x10] sm:$0xff]
    %v25 = vld [vmem:[%s0 + $0x18] sm:$0xff]
    %v26 = vld [vmem:[%s0 + $0x20] sm:$0xff]
    %v27 = vld [vmem:[%s0 + $0x28] sm:$0xff]
    %v28 = vld [vmem:[%s0 + $0x30] sm:$0xff]
    %v29 = vld [vmem:[%s0 + $0x38] sm:$0xff]
    %vm30 = vcmask 523264
    %31 = vst.msk [vmem:[#allocation2] sm:$0xff] %vm30, %v22
    %32 = vst.msk [vmem:[#allocation2 + $0x8] sm:$0xff] %vm30, %v23
    %33 = vst.msk [vmem:[#allocation2 + $0x10] sm:$0xff] %vm30, %v24
    %34 = vst.msk [vmem:[#allocation2 + $0x18] sm:$0xff] %vm30, %v25
    %35 = vst.msk [vmem:[#allocation2 + $0x20] sm:$0xff] %vm30, %v26
    %36 = vst.msk [vmem:[#allocation2 + $0x28] sm:$0xff] %vm30, %v27
    %37 = vst.msk [vmem:[#allocation2 + $0x30] sm:$0xff] %vm30, %v28
    %38 = vst.msk [vmem:[#allocation2 + $0x38] sm:$0xff] %vm30, %v29
    %v39 = vld [vmem:[%s1] sm:$0xff]
    %v40 = vld [vmem:[%s1 + $0x8] sm:$0xff]
    %v41 = vld [vmem:[%s1 + $0x10] sm:$0xff]
    %v42 = vld [vmem:[%s1 + $0x18] sm:$0xff]
    %v43 = vld [vmem:[%s1 + $0x20] sm:$0xff]
    %v44 = vld [vmem:[%s1 + $0x28] sm:$0xff]
    %v45 = vld [vmem:[%s1 + $0x30] sm:$0xff]
    %v46 = vld [vmem:[%s1 + $0x38] sm:$0xff]
    %55 = vrot.lane.b32.xlu0 %v39, 64
    %v56 = vpop.permute.xlu0 %55
    %57 = vrot.lane.b32.xlu0 %v40, 64
    %v58 = vpop.permute.xlu0 %57
    %59 = vrot.lane.b32.xlu0 %v41, 64
    %v60 = vpop.permute.xlu0 %59
    %61 = vrot.lane.b32.xlu0 %v42, 64
    %v62 = vpop.permute.xlu0 %61
    %63 = vrot.lane.b32.xlu0 %v43, 64
    %v64 = vpop.permute.xlu0 %63
    %65 = vrot.lane.b32.xlu0 %v44, 64
    %v66 = vpop.permute.xlu0 %65
    %67 = vrot.lane.b32.xlu0 %v45, 64
    %v68 = vpop.permute.xlu0 %67
    %69 = vrot.lane.b32.xlu0 %v46, 64
    %v70 = vpop.permute.xlu0 %69
    %vm79 = vcmask 654848
    %80 = vst.msk [vmem:[#allocation2] sm:$0xff] %vm79, %v56
    %81 = vst.msk [vmem:[#allocation2 + $0x8] sm:$0xff] %vm79, %v58
    %82 = vst.msk [vmem:[#allocation2 + $0x10] sm:$0xff] %vm79, %v60
    %83 = vst.msk [vmem:[#allocation2 + $0x18] sm:$0xff] %vm79, %v62
    %84 = vst.msk [vmem:[#allocation2 + $0x20] sm:$0xff] %vm79, %v64
    %85 = vst.msk [vmem:[#allocation2 + $0x28] sm:$0xff] %vm79, %v66
    %86 = vst.msk [vmem:[#allocation2 + $0x30] sm:$0xff] %vm79, %v68
    %87 = vst.msk [vmem:[#allocation2 + $0x38] sm:$0xff] %vm79, %v70
    %v88 = vld [vmem:[%s2] sm:$0xff]
    %v89 = vld [vmem:[%s2 + $0x8] sm:$0xff]
    %v90 = vld [vmem:[%s2 + $0x10] sm:$0xff]
    %v91 = vld [vmem:[%s2 + $0x18] sm:$0xff]
    %v92 = vld [vmem:[%s2 + $0x20] sm:$0xff]
    %v93 = vld [vmem:[%s2 + $0x28] sm:$0xff]
    %v94 = vld [vmem:[%s2 + $0x30] sm:$0xff]
    %v95 = vld [vmem:[%s2 + $0x38] sm:$0xff]
    %v96 = vpack.c.bf16 %v89, %v88
    %v97 = vpack.c.bf16 %v91, %v90
    %v98 = vpack.c.bf16 %v93, %v92
    %v99 = vpack.c.bf16 %v95, %v94
    %v100 = vld [vmem:[%s3] sm:$0xf]
    %v101 = vld [vmem:[%s3 + $0x4] sm:$0xf]
    %v102 = vld [vmem:[%s3 + $0x8] sm:$0xf]
    %v103 = vld [vmem:[%s3 + $0xc] sm:$0xf]
    %v104 = vld [vmem:[%s3 + $0x10] sm:$0xf]
    %v105 = vld [vmem:[%s3 + $0x14] sm:$0xf]
    %v106 = vld [vmem:[%s4] sm:$0x1]
    %v108 = vlaneseq
    %v109 = vshrl.u32 %v108, 7
    %v110 = vsub.s32 0, %v109
    %v111 = vrot.slane %v106, %v110
    %v119 = vunpack.c.l.b16 %v100
    %v120 = vunpack.c.l.b16 %v101
    %v121 = vunpack.c.l.b16 %v102
    %v122 = vunpack.c.l.b16 %v103
    %v123 = vunpack.c.l.b16 %v104
    %v124 = vunpack.c.l.b16 %v105
    %v125 = vpack.c.b16 %v120, %v119
    %v126 = vpack.c.b16 %v122, %v121
    %v127 = vpack.c.b16 %v124, %v123
    %vm131 = vcmask 392192
    %v133 = vsel %vm131, %v96, 0
    %v136 = vsel %vm131, %v97, 0
    %v139 = vsel %vm131, %v98, 0
    %v142 = vsel %vm131, %v99, 0
    %144 = vmatprep.subr.bf16.mxu0 0
    %145 = vmatpush1.bf16.msra.mxu0 %v125
    %146 = vmatprep.subr.bf16.mxu0 0
    %147 = vmatpush1.bf16.msra.mxu0 %v126
    %148 = vmatprep.subr.bf16.mxu0 0
    %149 = vmatpush1.bf16.msra.mxu0 %v127
    %150 = vmatprep.subr.bf16.mxu0 0
    %151 = vmatpush1.bf16.msra.mxu0 0
    %152 = vmatprep.subr.bf16.mxu0 0
    %153 = vmatpush1.bf16.msra.mxu0 0
    %154 = vmatprep.subr.bf16.mxu0 0
    %155 = vmatpush1.bf16.msra.mxu0 0
    %156 = vmatprep.subr.bf16.mxu0 0
    %157 = vmatpush1.bf16.msra.mxu0 0
    %158 = vmatprep.subr.bf16.mxu0 0
    %159 = vmatpush1.bf16.msra.mxu0 0
    %160 = vmatprep.subr.bf16.mxu0 0
    %161 = vmatpush1.bf16.msra.mxu0 0
    %162 = vmatprep.subr.bf16.mxu0 0
    %163 = vmatpush1.bf16.msra.mxu0 0
    %164 = vmatprep.subr.bf16.mxu0 0
    %165 = vmatpush1.bf16.msra.mxu0 0
    %166 = vmatprep.subr.bf16.mxu0 0
    %167 = vmatpush1.bf16.msra.mxu0 0
    %168 = vmatprep.subr.bf16.mxu0 0
    %169 = vmatpush1.bf16.msra.mxu0 0
    %170 = vmatprep.subr.bf16.mxu0 0
    %171 = vmatpush1.bf16.msra.mxu0 0
    %172 = vmatprep.subr.bf16.mxu0 0
    %173 = vmatpush1.bf16.msra.mxu0 0
    %174 = vmatprep.subr.bf16.mxu0 0
    %175 = vmatpush1.bf16.msra.mxu0 0
    %176 = vmatprep.mubr.bf16.mxu0 0
    %177 = vmatmul.mubr.bf16.gmra.mrb[0].mxu0 %v133
    %v178 = vpop.f32.mrb[0].mxu0
    %v179 = vadd.f32 %v111, %v178
    %v180 = vpop.f32.mrb[0].mxu0
    %v181 = vpop.f32.mrb[0].mxu0
    %v182 = vadd.f32 %v111, %v181
    %v183 = vpop.f32.mrb[0].mxu0
    %184 = vmatprep.mubr.bf16.mxu0 0
    %185 = vmatmul.mubr.bf16.gmra.mrb[0].mxu0 %v136
    %v186 = vpop.f32.mrb[0].mxu0
    %v187 = vadd.f32 %v111, %v186
    %v188 = vpop.f32.mrb[0].mxu0
    %v189 = vpop.f32.mrb[0].mxu0
    %v190 = vadd.f32 %v111, %v189
    %v191 = vpop.f32.mrb[0].mxu0
    %192 = vmatprep.mubr.bf16.mxu0 0
    %193 = vmatmul.mubr.bf16.gmra.mrb[0].mxu0 %v139
    %v194 = vpop.f32.mrb[0].mxu0
    %v195 = vadd.f32 %v111, %v194
    %v196 = vpop.f32.mrb[0].mxu0
    %v197 = vpop.f32.mrb[0].mxu0
    %v198 = vadd.f32 %v111, %v197
    %v199 = vpop.f32.mrb[0].mxu0
    %200 = vmatprep.mubr.bf16.mxu0 0
    %201 = vmatmul.mubr.bf16.gmra.mrb[0].mxu0 %v142
    %v202 = vpop.f32.mrb[0].mxu0
    %v203 = vadd.f32 %v111, %v202
    %v204 = vpop.f32.mrb[0].mxu0
    %v205 = vpop.f32.mrb[0].mxu0
    %v206 = vadd.f32 %v111, %v205
    %v207 = vpop.f32.mrb[0].mxu0
    %208 = vdwg.mxu0
    %v209 = vmax.f32 %v179, 0.0
    %v210 = vmax.f32 %v182, 0.0
    %v211 = vmax.f32 %v187, 0.0
    %v212 = vmax.f32 %v190, 0.0
    %v213 = vmax.f32 %v195, 0.0
    %v214 = vmax.f32 %v198, 0.0
    %v215 = vmax.f32 %v203, 0.0
    %v216 = vmax.f32 %v206, 0.0
    %225 = vrot.lane.b32.xlu0 %v209, 112
    %v226 = vpop.permute.xlu0 %225
    %227 = vrot.lane.b32.xlu0 %v210, 112
    %v228 = vpop.permute.xlu0 %227
    %229 = vrot.lane.b32.xlu0 %v211, 112
    %v230 = vpop.permute.xlu0 %229
    %231 = vrot.lane.b32.xlu0 %v212, 112
    %v232 = vpop.permute.xlu0 %231
    %233 = vrot.lane.b32.xlu0 %v213, 112
    %v234 = vpop.permute.xlu0 %233
    %235 = vrot.lane.b32.xlu0 %v214, 112
    %v236 = vpop.permute.xlu0 %235
    %237 = vrot.lane.b32.xlu0 %v215, 112
    %v238 = vpop.permute.xlu0 %237
    %239 = vrot.lane.b32.xlu0 %v216, 112
    %v240 = vpop.permute.xlu0 %239
    %v249 = vmax.f32 %v209, %v226
    %v250 = vmax.f32 %v210, %v228
    %v251 = vmax.f32 %v211, %v230
    %v252 = vmax.f32 %v212, %v232
    %v253 = vmax.f32 %v213, %v234
    %v254 = vmax.f32 %v214, %v236
    %v255 = vmax.f32 %v215, %v238
    %v256 = vmax.f32 %v216, %v240
    %257 = vrot.lane.b32.xlu0 %v209, 96
    %v258 = vpop.permute.xlu0 %257
    %259 = vrot.lane.b32.xlu0 %v210, 96
    %v260 = vpop.permute.xlu0 %259
    %261 = vrot.lane.b32.xlu0 %v211, 96
    %v262 = vpop.permute.xlu0 %261
    %263 = vrot.lane.b32.xlu0 %v212, 96
    %v264 = vpop.permute.xlu0 %263
    %265 = vrot.lane.b32.xlu0 %v213, 96
    %v266 = vpop.permute.xlu0 %265
    %267 = vrot.lane.b32.xlu0 %v214, 96
    %v268 = vpop.permute.xlu0 %267
    %269 = vrot.lane.b32.xlu0 %v215, 96
    %v270 = vpop.permute.xlu0 %269
    %271 = vrot.lane.b32.xlu0 %v216, 96
    %v272 = vpop.permute.xlu0 %271
    %v281 = vmax.f32 %v249, %v258
    %v282 = vmax.f32 %v250, %v260
    %v283 = vmax.f32 %v251, %v262
    %v284 = vmax.f32 %v252, %v264
    %v285 = vmax.f32 %v253, %v266
    %v286 = vmax.f32 %v254, %v268
    %v287 = vmax.f32 %v255, %v270
    %v288 = vmax.f32 %v256, %v272
    %289 = vrot.lane.b32.xlu0 %v209, 80
    %v290 = vpop.permute.xlu0 %289
    %291 = vrot.lane.b32.xlu0 %v210, 80
    %v292 = vpop.permute.xlu0 %291
    %293 = vrot.lane.b32.xlu0 %v211, 80
    %v294 = vpop.permute.xlu0 %293
    %295 = vrot.lane.b32.xlu0 %v212, 80
    %v296 = vpop.permute.xlu0 %295
    %297 = vrot.lane.b32.xlu0 %v213, 80
    %v298 = vpop.permute.xlu0 %297
    %299 = vrot.lane.b32.xlu0 %v214, 80
    %v300 = vpop.permute.xlu0 %299
    %301 = vrot.lane.b32.xlu0 %v215, 80
    %v302 = vpop.permute.xlu0 %301
    %303 = vrot.lane.b32.xlu0 %v216, 80
    %v304 = vpop.permute.xlu0 %303
    %v313 = vmax.f32 %v281, %v290
    %v314 = vmax.f32 %v282, %v292
    %v315 = vmax.f32 %v283, %v294
    %v316 = vmax.f32 %v284, %v296
    %v317 = vmax.f32 %v285, %v298
    %v318 = vmax.f32 %v286, %v300
    %v319 = vmax.f32 %v287, %v302
    %v320 = vmax.f32 %v288, %v304
    %329 = vrot.lane.b32.xlu0 %v313, 80
    %v330 = vpop.permute.xlu0 %329
    %331 = vrot.lane.b32.xlu0 %v314, 80
    %v332 = vpop.permute.xlu0 %331
    %333 = vrot.lane.b32.xlu0 %v315, 80
    %v334 = vpop.permute.xlu0 %333
    %335 = vrot.lane.b32.xlu0 %v316, 80
    %v336 = vpop.permute.xlu0 %335
    %337 = vrot.lane.b32.xlu0 %v317, 80
    %v338 = vpop.permute.xlu0 %337
    %339 = vrot.lane.b32.xlu0 %v318, 80
    %v340 = vpop.permute.xlu0 %339
    %341 = vrot.lane.b32.xlu0 %v319, 80
    %v342 = vpop.permute.xlu0 %341
    %343 = vrot.lane.b32.xlu0 %v320, 80
    %v344 = vpop.permute.xlu0 %343
    %vm353 = vcmask 786048
    %354 = vst.msk [vmem:[#allocation2] sm:$0xff] %vm353, %v330
    %355 = vst.msk [vmem:[#allocation2 + $0x8] sm:$0xff] %vm353, %v332
    %356 = vst.msk [vmem:[#allocation2 + $0x10] sm:$0xff] %vm353, %v334
    %357 = vst.msk [vmem:[#allocation2 + $0x18] sm:$0xff] %vm353, %v336
    %358 = vst.msk [vmem:[#allocation2 + $0x20] sm:$0xff] %vm353, %v338
    %359 = vst.msk [vmem:[#allocation2 + $0x28] sm:$0xff] %vm353, %v340
    %360 = vst.msk [vmem:[#allocation2 + $0x30] sm:$0xff] %vm353, %v342
    %361 = vst.msk [vmem:[#allocation2 + $0x38] sm:$0xff] %vm353, %v344
    // Predicated region
    $region22: #{tpu_custom_call.1} parent=1 // pred_check
      _
    $region23: #{tpu_custom_call.1} parent=1 // pred_check_branch
      %363 = sbr.rel (0) target = $region25
    $region24: #{tpu_custom_call.1} parent=1 // pred_region
      %s365 = ssub.s32 1024, 1024
      %366 = vsyncadd [#allocation3], %s365
      %s367 = sshll.u32 [#allocation2], 4
      %s368 = int_to_ptr.vmem [resolvable:$true] %s367
      %373 = dma.vmem_to_hbm [thread:$0]  %s368, 1024, %s5, [#allocation3], 128, 128, 8
    $region25: #{tpu_custom_call.1} parent=1 // pred_fallthru
      _
    // Predicated region
    $region26: #{tpu_custom_call.1} parent=1 // pred_check
      _
    $region27: #{tpu_custom_call.1} parent=1 // pred_check_branch
      %375 = sbr.rel (0) target = $region29
    $region28: #{tpu_custom_call.1} parent=1 // pred_region
      %376 = dma.done [#allocation3], 1024
    $region29: #{tpu_custom_call.1} parent=1 // pred_fallthru
      _
    %377 = vsyncpa [#allocation3], 1

</llo_original>
